<compile_context>
chip_gen: v6e
topology: v6e:2x2x1
jax: 0.10.0
libtpu: 0.0.40
codegen_flags: <defaults>
</compile_context>

<pallas_src>
import jax
import jax.numpy as jnp
from jax.experimental import pallas as pl
from jax.experimental.pallas import tpu as pltpu


def _fusion_kernel(x_ref, w1_ref, b1_ref, w2_ref, b2_ref, wc_ref, bc_ref,
                   o_ref):
    cdt = x_ref.dtype                        # compute (MXU operand) dtype
    x = x_ref[...]                           # (N*Din, B*P)

    # Per-feature MLPs, block-diagonalized into one 128-wide contraction:
    #   h = relu(W1_bd @ x + b1)
    h = jnp.dot(w1_ref[...], x, preferred_element_type=jnp.float32)
    h = jnp.maximum(h + b1_ref[...], 0.0)    # f32 elementwise

    #   y = W2_bd @ h + b2
    y = jnp.dot(w2_ref[...], h.astype(cdt), preferred_element_type=jnp.float32)
    y = y + b2_ref[...]

    # 1x1 conv over the stacked N*Dout channel axis: out = Wc @ y + bc
    out = jnp.dot(wc_ref[...], y.astype(cdt), preferred_element_type=jnp.float32)
    # Dropout in eval mode is identity; lane-dense (O, B*P) store.
    o_ref[...] = (out + bc_ref[...]).astype(o_ref.dtype)


def _block_diag(w):
    """(N, A, B) -> (N*A, N*B) block-diagonal matrix (wrapper-side packing)."""
    N, A, B = w.shape
    eye = jnp.eye(N, dtype=w.dtype)
    return jnp.einsum('nm,nab->namb', eye, w).reshape(N * A, N * B)


def feature_fusion(x, w1, b1, w2, b2, wc, bc, *, compute_dtype=jnp.bfloat16):
    """x: (B, N, H, W, Din).  Returns (B, H, W, O)."""
    B, N, H, W, Din = x.shape
    Dout = w1.shape[1]
    O = wc.shape[0]
    P = H * W
    BP = B * P
    K1 = N * Din          # contraction width of matmul 1 (= 128 at toy shapes)
    K2 = N * Dout         # contraction width of matmuls 2/3

    # ---- Wrapper-side layout plumbing (outside the kernel, done once) ----
    # x -> (N*Din, B*P): channels on sublanes, fused batch*spatial on lanes.
    x_t = jnp.transpose(x.reshape(B, N, P, Din), (1, 3, 0, 2)).reshape(K1, BP)
    # Per-feature weights -> block-diagonal; contraction runs over the weight's
    # trailing dim directly (no in-kernel transpose).
    w1_bd = _block_diag(w1)                  # (N*Dout, N*Din)
    w2_bd = _block_diag(w2)                  # (N*Dout, N*Dout)
    b1_c = b1.reshape(K2, 1).astype(jnp.float32)
    b2_c = b2.reshape(K2, 1).astype(jnp.float32)
    bc_c = bc.reshape(O, 1).astype(jnp.float32)

    x_t = x_t.astype(compute_dtype)
    w1_bd = w1_bd.astype(compute_dtype)
    w2_bd = w2_bd.astype(compute_dtype)
    wc_c = wc.astype(compute_dtype)          # (O, N*Dout)

    def full(shape):
        return pl.BlockSpec(shape, lambda i, _s=shape: (0,) * len(_s))

    out_t = pl.pallas_call(
        _fusion_kernel,
        out_shape=jax.ShapeDtypeStruct((O, BP), jnp.float32),
        grid_spec=pltpu.PrefetchScalarGridSpec(
            num_scalar_prefetch=0,
            grid=(1,),                       # single invocation: whole problem fits in VMEM
            in_specs=[
                full((K1, BP)),              # x_t
                full((K2, K1)),              # W1 block-diag
                full((K2, 1)),               # b1
                full((K2, K2)),              # W2 block-diag
                full((K2, 1)),               # b2
                full((O, K2)),               # conv weight
                full((O, 1)),                # conv bias
            ],
            out_specs=full((O, BP)),
        ),
        compiler_params=pltpu.CompilerParams(
            dimension_semantics=("arbitrary",),
            vmem_limit_bytes=32 * 1024 * 1024),
    )(x_t, w1_bd, b1_c, w2_bd, b2_c, wc_c, bc_c)

    # (O, B*P) -> (B, H, W, O): pure layout, handled by XLA outside the kernel.
    return jnp.transpose(out_t, (1, 0)).reshape(B, H, W, O).astype(x.dtype)


def feature_fusion_ref(x, w1, b1, w2, b2, wc, bc):
    """Pure-JAX reference mirroring the PyTorch forward (dropout=eval)."""
    B, N, H, W, Din = x.shape
    Dout = w1.shape[1]
    O = wc.shape[0]
    ys = []
    for n in range(N):
        h = jax.nn.relu(jnp.einsum('bhwi,oi->bhwo', x[:, n], w1[n]) + b1[n])
        y = jnp.einsum('bhwi,oi->bhwo', h, w2[n]) + b2[n]
        ys.append(y)
    y = jnp.stack(ys, axis=1)                      # (B, N, H, W, Dout)
    y = jnp.transpose(y, (0, 1, 4, 2, 3)).reshape(B, N * Dout, H, W)
    out = jnp.einsum('bchw,oc->bohw', y, wc) + bc[None, :, None, None]
    return jnp.transpose(out, (0, 2, 3, 1))        # (B, H, W, O)


if __name__ == "__main__":
    B, N, H, W = 2, 4, 8, 8
    Din = Dout = O = 32

    key = jax.random.PRNGKey(0)
    keys = jax.random.split(key, 8)
    x = jax.random.normal(keys[0], (B, N, H, W, Din), dtype=jnp.float32)
    w1 = jax.random.normal(keys[1], (N, Dout, Din), dtype=jnp.float32) * 0.05
    b1 = jax.random.normal(keys[2], (N, Dout), dtype=jnp.float32) * 0.05
    w2 = jax.random.normal(keys[3], (N, Dout, Dout), dtype=jnp.float32) * 0.05
    b2 = jax.random.normal(keys[4], (N, Dout), dtype=jnp.float32) * 0.05
    wc = jax.random.normal(keys[5], (O, N * Dout), dtype=jnp.float32) * 0.05
    bc = jax.random.normal(keys[6], (O,), dtype=jnp.float32) * 0.05

    ref = feature_fusion_ref(x, w1, b1, w2, b2, wc, bc)

    # f32 operand path: bit-tight check against the reference.
    out_f32 = feature_fusion(x, w1, b1, w2, b2, wc, bc,
                             compute_dtype=jnp.float32)
    out_f32 = jax.block_until_ready(out_f32)
    assert out_f32.shape == (B, H, W, O), out_f32.shape
    assert jnp.allclose(out_f32, ref, rtol=1e-4, atol=1e-4), float(
        jnp.max(jnp.abs(out_f32 - ref)))

    # Default bf16 MXU-operand path (f32 accumulation): looser tolerance.
    out_bf16 = feature_fusion(x, w1, b1, w2, b2, wc, bc)
    out_bf16 = jax.block_until_ready(out_bf16)
    assert out_bf16.shape == (B, H, W, O), out_bf16.shape
    assert jnp.allclose(out_bf16, ref, rtol=2e-2, atol=2e-2), float(
        jnp.max(jnp.abs(out_bf16 - ref)))

    print("KERNEL_OK")
</pallas_src>

<mosaic_0001>
module attributes {stable_mosaic.version = 11 : i64} {
  func.func @_fusion_kernel(%arg0: i32, %arg1: memref<128x128xf32, #tpu.memory_space<vmem>>, %arg2: memref<128x128xf32, #tpu.memory_space<vmem>>, %arg3: memref<128x1xf32, #tpu.memory_space<vmem>>, %arg4: memref<128x128xf32, #tpu.memory_space<vmem>>, %arg5: memref<128x1xf32, #tpu.memory_space<vmem>>, %arg6: memref<32x128xf32, #tpu.memory_space<vmem>>, %arg7: memref<32x1xf32, #tpu.memory_space<vmem>>, %arg8: memref<32x128xf32, #tpu.memory_space<vmem>>) attributes {dimension_semantics = [#tpu.dimension_semantics<arbitrary>], iteration_bounds = array<i64: 1>, scalar_prefetch = 0 : i64, scratch_operands = 0 : i64, tpu.core_type = #tpu.core_type<tc>, window_params = [{pipeline_mode = #tpu.pipeline_mode<synchronous>, transform_indices = @transform_0, window_bounds = array<i64: 128, 128>}, {pipeline_mode = #tpu.pipeline_mode<synchronous>, transform_indices = @transform_1, window_bounds = array<i64: 128, 128>}, {pipeline_mode = #tpu.pipeline_mode<synchronous>, transform_indices = @transform_2, window_bounds = array<i64: 128, 1>}, {pipeline_mode = #tpu.pipeline_mode<synchronous>, transform_indices = @transform_3, window_bounds = array<i64: 128, 128>}, {pipeline_mode = #tpu.pipeline_mode<synchronous>, transform_indices = @transform_4, window_bounds = array<i64: 128, 1>}, {pipeline_mode = #tpu.pipeline_mode<synchronous>, transform_indices = @transform_5, window_bounds = array<i64: 32, 128>}, {pipeline_mode = #tpu.pipeline_mode<synchronous>, transform_indices = @transform_6, window_bounds = array<i64: 32, 1>}, {pipeline_mode = #tpu.pipeline_mode<synchronous>, transform_indices = @transform_7, window_bounds = array<i64: 32, 128>}]} {
    %c0 = arith.constant 0 : index
    %c0_0 = arith.constant 0 : index
    %0 = vector.load %arg1[%c0, %c0_0] : memref<128x128xf32, #tpu.memory_space<vmem>>, vector<128x128xf32>
    %c0_1 = arith.constant 0 : index
    %c0_2 = arith.constant 0 : index
    %1 = vector.load %arg2[%c0_1, %c0_2] : memref<128x128xf32, #tpu.memory_space<vmem>>, vector<128x128xf32>
    %cst = arith.constant dense<0.000000e+00> : vector<128x128xf32>
    %2 = tpu.matmul %1, %0, %cst {dimension_numbers = #tpu.dot_dimension_numbers<[1], [0], [0], [1], [0, 0, 1, 1], [], []>} : vector<128x128xf32>, vector<128x128xf32>, vector<128x128xf32> -> vector<128x128xf32>
    %c0_3 = arith.constant 0 : index
    %c0_4 = arith.constant 0 : index
    %3 = vector.load %arg3[%c0_3, %c0_4] : memref<128x1xf32, #tpu.memory_space<vmem>>, vector<128x1xf32>
    %4 = vector.broadcast %3 : vector<128x1xf32> to vector<128x128xf32>
    %5 = arith.addf %2, %4 : vector<128x128xf32>
    %cst_5 = arith.constant 0.000000e+00 : f32
    %6 = vector.broadcast %cst_5 : f32 to vector<128x128xf32>
    %7 = arith.maximumf %5, %6 : vector<128x128xf32>
    %c0_6 = arith.constant 0 : index
    %c0_7 = arith.constant 0 : index
    %8 = vector.load %arg4[%c0_6, %c0_7] : memref<128x128xf32, #tpu.memory_space<vmem>>, vector<128x128xf32>
    %cst_8 = arith.constant dense<0.000000e+00> : vector<128x128xf32>
    %9 = tpu.matmul %8, %7, %cst_8 {dimension_numbers = #tpu.dot_dimension_numbers<[1], [0], [0], [1], [0, 0, 1, 1], [], []>} : vector<128x128xf32>, vector<128x128xf32>, vector<128x128xf32> -> vector<128x128xf32>
    %c0_9 = arith.constant 0 : index
    %c0_10 = arith.constant 0 : index
    %10 = vector.load %arg5[%c0_9, %c0_10] : memref<128x1xf32, #tpu.memory_space<vmem>>, vector<128x1xf32>
    %11 = vector.broadcast %10 : vector<128x1xf32> to vector<128x128xf32>
    %12 = arith.addf %9, %11 : vector<128x128xf32>
    %c0_11 = arith.constant 0 : index
    %c0_12 = arith.constant 0 : index
    %13 = vector.load %arg6[%c0_11, %c0_12] : memref<32x128xf32, #tpu.memory_space<vmem>>, vector<32x128xf32>
    %cst_13 = arith.constant dense<0.000000e+00> : vector<32x128xf32>
    %14 = tpu.matmul %13, %12, %cst_13 {dimension_numbers = #tpu.dot_dimension_numbers<[1], [0], [0], [1], [0, 0, 1, 1], [], []>} : vector<32x128xf32>, vector<128x128xf32>, vector<32x128xf32> -> vector<32x128xf32>
    %c0_14 = arith.constant 0 : index
    %c0_15 = arith.constant 0 : index
    %15 = vector.load %arg7[%c0_14, %c0_15] : memref<32x1xf32, #tpu.memory_space<vmem>>, vector<32x1xf32>
    %16 = vector.broadcast %15 : vector<32x1xf32> to vector<32x128xf32>
    %17 = arith.addf %14, %16 : vector<32x128xf32>
    %c0_16 = arith.constant 0 : index
    %c0_17 = arith.constant 0 : index
    %18 = vector.load %arg8[%c0_16, %c0_17] : memref<32x128xf32, #tpu.memory_space<vmem>>, vector<32x128xf32>
    tpu.vector_store %arg8[%c0_16, %c0_17], %17 {strides = array<i32>} : memref<32x128xf32, #tpu.memory_space<vmem>>, vector<32x128xf32>,
    return
  }
  func.func @transform_0(%arg0: i32) -> (i32, i32) {
    %c0_i32 = arith.constant 0 : i32
    %c0_i32_0 = arith.constant 0 : i32
    %c0_i32_1 = arith.constant 0 : i32
    return %c0_i32, %c0_i32_0 : i32, i32
  }
  func.func @transform_1(%arg0: i32) -> (i32, i32) {
    %c0_i32 = arith.constant 0 : i32
    %c0_i32_0 = arith.constant 0 : i32
    %c0_i32_1 = arith.constant 0 : i32
    return %c0_i32, %c0_i32_0 : i32, i32
  }
  func.func @transform_2(%arg0: i32) -> (i32, i32) {
    %c0_i32 = arith.constant 0 : i32
    %c0_i32_0 = arith.constant 0 : i32
    %c0_i32_1 = arith.constant 0 : i32
    return %c0_i32, %c0_i32_0 : i32, i32
  }
  func.func @transform_3(%arg0: i32) -> (i32, i32) {
    %c0_i32 = arith.constant 0 : i32
    %c0_i32_0 = arith.constant 0 : i32
    %c0_i32_1 = arith.constant 0 : i32
    return %c0_i32, %c0_i32_0 : i32, i32
  }
  func.func @transform_4(%arg0: i32) -> (i32, i32) {
    %c0_i32 = arith.constant 0 : i32
    %c0_i32_0 = arith.constant 0 : i32
    %c0_i32_1 = arith.constant 0 : i32
    return %c0_i32, %c0_i32_0 : i32, i32
  }
  func.func @transform_5(%arg0: i32) -> (i32, i32) {
    %c0_i32 = arith.constant 0 : i32
    %c0_i32_0 = arith.constant 0 : i32
    %c0_i32_1 = arith.constant 0 : i32
    return %c0_i32, %c0_i32_0 : i32, i32
  }
  func.func @transform_6(%arg0: i32) -> (i32, i32) {
    %c0_i32 = arith.constant 0 : i32
    %c0_i32_0 = arith.constant 0 : i32
    %c0_i32_1 = arith.constant 0 : i32
    return %c0_i32, %c0_i32_0 : i32, i32
  }
  func.func @transform_7(%arg0: i32) -> (i32, i32) {
    %c0_i32 = arith.constant 0 : i32
    %c0_i32_0 = arith.constant 0 : i32
    %c0_i32_1 = arith.constant 0 : i32
    return %c0_i32, %c0_i32_0 : i32, i32
  }
}

</mosaic_0001>

<llo_original>
// kernel: tpu_custom_call.1
$region0: #{tpu_custom_call.1}
  #allocation0 [shape = 'u32[]', space=smem, size = 0x4, offset = 0x4, fixed_abs, tag = 'smem constant byte address 0x4 - core index']
  #allocation1 [shape = 'u32[144,128]{1,0:T(1,128)}', space=vmem, size = 0x12000, scoped, tag = 'internal scratch']
  %s0 = inlined_call_operand.vmem [shape: f32[128,128], index: 0, kind: input, shape index: {}]
  %s1 = inlined_call_operand.vmem [shape: f32[128,128], index: 1, kind: input, shape index: {}]
  %s2 = inlined_call_operand.vmem [shape: f32[128,1], index: 2, kind: input, shape index: {}]
  %s3 = inlined_call_operand.hbm [shape: f32[128,128], index: 3, kind: input, shape index: {}]
  %s4 = inlined_call_operand.vmem [shape: f32[128,1], index: 4, kind: input, shape index: {}]
  %s5 = inlined_call_operand.vmem [shape: f32[32,128], index: 5, kind: input, shape index: {}]
  %s6 = inlined_call_operand.vmem [shape: f32[32,1], index: 6, kind: input, shape index: {}]
  %s7 = inlined_call_operand.hbm [shape: f32[32,128], index: 7, kind: output, shape index: {}]
  %s8 = sld [smem:[#allocation0]]
  $region42: #{tpu_custom_call.1} parent=0
    _
  %s10 = ssub.s32 1, %s8
  %s11 = scalar_select 0, %s10, %s8
  $region1: #{tpu_custom_call.1} parent=0
    #allocation2 [shape = 'u8[65536]{0}', space=vmem, size = 0x10000, scoped, tag = 'input window, operand 3, single buffered']
    #allocation3 [shape = 's32[1]{0}', space=sflag, size = 0x4, scoped, tag = 'scoped memory for tpu_custom_call.1']
    #allocation4 [shape = 's32[1]{0}', space=sflag, size = 0x4, scoped, tag = 'scoped memory for tpu_custom_call.1']
    #allocation5 [shape = 'u8[16384]{0}', space=vmem, size = 0x4000, scoped, tag = 'output window, operand 0, single buffered']
    %12 = vsyncpa [#allocation3], 0
    %13 = vsyncpa [#allocation4], 0
    // Predicated region
    $region2: #{tpu_custom_call.1} parent=1 // pred_check
      _
    $region3: #{tpu_custom_call.1} parent=1 // pred_check_branch
      %15 = sbr.rel (0) target = $region5
    $region4: #{tpu_custom_call.1} parent=1 // pred_region
      _
    $region5: #{tpu_custom_call.1} parent=1 // pred_fallthru
      _
    // Predicated region
    $region6: #{tpu_custom_call.1} parent=1 // pred_check
      _
    $region7: #{tpu_custom_call.1} parent=1 // pred_check_branch
      %17 = sbr.rel (0) target = $region9
    $region8: #{tpu_custom_call.1} parent=1 // pred_region
      _
    $region9: #{tpu_custom_call.1} parent=1 // pred_fallthru
      _
    // Predicated region
    $region10: #{tpu_custom_call.1} parent=1 // pred_check
      _
    $region11: #{tpu_custom_call.1} parent=1 // pred_check_branch
      %19 = sbr.rel (0) target = $region13
    $region12: #{tpu_custom_call.1} parent=1 // pred_region
      _
    $region13: #{tpu_custom_call.1} parent=1 // pred_fallthru
      _
    // Predicated region
    $region14: #{tpu_custom_call.1} parent=1 // pred_check
      _
    $region15: #{tpu_custom_call.1} parent=1 // pred_check_branch
      %21 = sbr.rel (0) target = $region17
    $region16: #{tpu_custom_call.1} parent=1 // pred_region
      %s23 = ssub.s32 2048, 2048
      %24 = vsyncadd [#allocation3], %s23
      %s25 = sshll.u32 [#allocation2], 4
      %s26 = int_to_ptr.vmem [resolvable:$true] %s25
      %31 = dma.hbm_to_vmem [thread:$0]  %s3, 2048, %s26, [#allocation3], 128, 128, 8
    $region17: #{tpu_custom_call.1} parent=1 // pred_fallthru
      _
    // Predicated region
    $region18: #{tpu_custom_call.1} parent=1 // pred_check
      _
    $region19: #{tpu_custom_call.1} parent=1 // pred_check_branch
      %33 = sbr.rel (0) target = $region21
    $region20: #{tpu_custom_call.1} parent=1 // pred_region
      _
    $region21: #{tpu_custom_call.1} parent=1 // pred_fallthru
      _
    // Predicated region
    $region22: #{tpu_custom_call.1} parent=1 // pred_check
      _
    $region23: #{tpu_custom_call.1} parent=1 // pred_check_branch
      %35 = sbr.rel (0) target = $region25
    $region24: #{tpu_custom_call.1} parent=1 // pred_region
      _
    $region25: #{tpu_custom_call.1} parent=1 // pred_fallthru
      _
    // Predicated region
    $region26: #{tpu_custom_call.1} parent=1 // pred_check
      _
    $region27: #{tpu_custom_call.1} parent=1 // pred_check_branch
      %37 = sbr.rel (0) target = $region29
    $region28: #{tpu_custom_call.1} parent=1 // pred_region
      _
    $region29: #{tpu_custom_call.1} parent=1 // pred_fallthru
      _
    // Predicated region
    $region30: #{tpu_custom_call.1} parent=1 // pred_check
      _
    $region31: #{tpu_custom_call.1} parent=1 // pred_check_branch
      %39 = sbr.rel (0) target = $region33
    $region32: #{tpu_custom_call.1} parent=1 // pred_region
      %40 = dma.done [#allocation3], 2048
    $region33: #{tpu_custom_call.1} parent=1 // pred_fallthru
      _
    %v41 = vld [vmem:[%s0] sm:$0xff]
    %v42 = vld [vmem:[%s0 + $0x8] sm:$0xff]
    %v43 = vld [vmem:[%s0 + $0x10] sm:$0xff]
    %v44 = vld [vmem:[%s0 + $0x18] sm:$0xff]
    %v45 = vld [vmem:[%s0 + $0x20] sm:$0xff]
    %v46 = vld [vmem:[%s0 + $0x28] sm:$0xff]
    %v47 = vld [vmem:[%s0 + $0x30] sm:$0xff]
    %v48 = vld [vmem:[%s0 + $0x38] sm:$0xff]
    %v49 = vld [vmem:[%s0 + $0x40] sm:$0xff]
    %v50 = vld [vmem:[%s0 + $0x48] sm:$0xff]
    %v51 = vld [vmem:[%s0 + $0x50] sm:$0xff]
    %v52 = vld [vmem:[%s0 + $0x58] sm:$0xff]
    %v53 = vld [vmem:[%s0 + $0x60] sm:$0xff]
    %v54 = vld [vmem:[%s0 + $0x68] sm:$0xff]
    %v55 = vld [vmem:[%s0 + $0x70] sm:$0xff]
    %v56 = vld [vmem:[%s0 + $0x78] sm:$0xff]
    %v57 = vld [vmem:[%s1] sm:$0xff]
    %v58 = vld [vmem:[%s1 + $0x8] sm:$0xff]
    %v59 = vld [vmem:[%s1 + $0x10] sm:$0xff]
    %v60 = vld [vmem:[%s1 + $0x18] sm:$0xff]
    %v61 = vld [vmem:[%s1 + $0x20] sm:$0xff]
    %v62 = vld [vmem:[%s1 + $0x28] sm:$0xff]
    %v63 = vld [vmem:[%s1 + $0x30] sm:$0xff]
    %v64 = vld [vmem:[%s1 + $0x38] sm:$0xff]
    %v65 = vld [vmem:[%s1 + $0x40] sm:$0xff]
    %v66 = vld [vmem:[%s1 + $0x48] sm:$0xff]
    %v67 = vld [vmem:[%s1 + $0x50] sm:$0xff]
    %v68 = vld [vmem:[%s1 + $0x58] sm:$0xff]
    %v69 = vld [vmem:[%s1 + $0x60] sm:$0xff]
    %v70 = vld [vmem:[%s1 + $0x68] sm:$0xff]
    %v71 = vld [vmem:[%s1 + $0x70] sm:$0xff]
    %v72 = vld [vmem:[%s1 + $0x78] sm:$0xff]
    %v73 = vld [vmem:[%s2] sm:$0xff]
    %v74 = vld [vmem:[%s2 + $0x8] sm:$0xff]
    %v75 = vld [vmem:[%s2 + $0x10] sm:$0xff]
    %v76 = vld [vmem:[%s2 + $0x18] sm:$0xff]
    %v77 = vld [vmem:[%s2 + $0x20] sm:$0xff]
    %v78 = vld [vmem:[%s2 + $0x28] sm:$0xff]
    %v79 = vld [vmem:[%s2 + $0x30] sm:$0xff]
    %v80 = vld [vmem:[%s2 + $0x38] sm:$0xff]
    %v81 = vld [vmem:[%s2 + $0x40] sm:$0xff]
    %v82 = vld [vmem:[%s2 + $0x48] sm:$0xff]
    %v83 = vld [vmem:[%s2 + $0x50] sm:$0xff]
    %v84 = vld [vmem:[%s2 + $0x58] sm:$0xff]
    %v85 = vld [vmem:[%s2 + $0x60] sm:$0xff]
    %v86 = vld [vmem:[%s2 + $0x68] sm:$0xff]
    %v87 = vld [vmem:[%s2 + $0x70] sm:$0xff]
    %v88 = vld [vmem:[%s2 + $0x78] sm:$0xff]
    %90 = vset.pattern.permute.xlu0 0
    %91 = vperm.xlu0 %90, %v73
    %v92 = vpop.permute.xlu0 %91
    %95 = vset.pattern.permute.xlu0 0
    %96 = vperm.xlu0 %95, %v74
    %v97 = vpop.permute.xlu0 %96
    %100 = vset.pattern.permute.xlu0 0
    %101 = vperm.xlu0 %100, %v75
    %v102 = vpop.permute.xlu0 %101
    %105 = vset.pattern.permute.xlu0 0
    %106 = vperm.xlu0 %105, %v76
    %v107 = vpop.permute.xlu0 %106
    %110 = vset.pattern.permute.xlu0 0
    %111 = vperm.xlu0 %110, %v77
    %v112 = vpop.permute.xlu0 %111
    %115 = vset.pattern.permute.xlu0 0
    %116 = vperm.xlu0 %115, %v78
    %v117 = vpop.permute.xlu0 %116
    %120 = vset.pattern.permute.xlu0 0
    %121 = vperm.xlu0 %120, %v79
    %v122 = vpop.permute.xlu0 %121
    %125 = vset.pattern.permute.xlu0 0
    %126 = vperm.xlu0 %125, %v80
    %v127 = vpop.permute.xlu0 %126
    %130 = vset.pattern.permute.xlu0 0
    %131 = vperm.xlu0 %130, %v81
    %v132 = vpop.permute.xlu0 %131
    %135 = vset.pattern.permute.xlu0 0
    %136 = vperm.xlu0 %135, %v82
    %v137 = vpop.permute.xlu0 %136
    %140 = vset.pattern.permute.xlu0 0
    %141 = vperm.xlu0 %140, %v83
    %v142 = vpop.permute.xlu0 %141
    %145 = vset.pattern.permute.xlu0 0
    %146 = vperm.xlu0 %145, %v84
    %v147 = vpop.permute.xlu0 %146
    %150 = vset.pattern.permute.xlu0 0
    %151 = vperm.xlu0 %150, %v85
    %v152 = vpop.permute.xlu0 %151
    %155 = vset.pattern.permute.xlu0 0
    %156 = vperm.xlu0 %155, %v86
    %v157 = vpop.permute.xlu0 %156
    %160 = vset.pattern.permute.xlu0 0
    %161 = vperm.xlu0 %160, %v87
    %v162 = vpop.permute.xlu0 %161
    %165 = vset.pattern.permute.xlu0 0
    %166 = vperm.xlu0 %165, %v88
    %v167 = vpop.permute.xlu0 %166
    %169 = vmatprep.subr.mxu0 0.0
    %170 = vmatpush1.msra.mxu0 %v56
    %171 = vmatprep.subr.mxu0 0.0
    %172 = vmatpush1.msra.mxu0 %v55
    %173 = vmatprep.subr.mxu0 0.0
    %174 = vmatpush1.msra.mxu0 %v54
    %175 = vmatprep.subr.mxu0 0.0
    %176 = vmatpush1.msra.mxu0 %v53
    %177 = vmatprep.subr.mxu0 0.0
    %178 = vmatpush1.msra.mxu0 %v52
    %179 = vmatprep.subr.mxu0 0.0
    %180 = vmatpush1.msra.mxu0 %v51
    %181 = vmatprep.subr.mxu0 0.0
    %182 = vmatpush1.msra.mxu0 %v50
    %183 = vmatprep.subr.mxu0 0.0
    %184 = vmatpush1.msra.mxu0 %v49
    %185 = vmatprep.subr.mxu0 0.0
    %186 = vmatpush1.msra.mxu0 %v48
    %187 = vmatprep.subr.mxu0 0.0
    %188 = vmatpush1.msra.mxu0 %v47
    %189 = vmatprep.subr.mxu0 0.0
    %190 = vmatpush1.msra.mxu0 %v46
    %191 = vmatprep.subr.mxu0 0.0
    %192 = vmatpush1.msra.mxu0 %v45
    %193 = vmatprep.subr.mxu0 0.0
    %194 = vmatpush1.msra.mxu0 %v44
    %195 = vmatprep.subr.mxu0 0.0
    %196 = vmatpush1.msra.mxu0 %v43
    %197 = vmatprep.subr.mxu0 0.0
    %198 = vmatpush1.msra.mxu0 %v42
    %199 = vmatprep.subr.mxu0 0.0
    %200 = vmatpush1.msra.mxu0 %v41
    %201 = vmatprep.subr.mxu0 0.0
    %202 = vmatpush2.msra.mxu0 0.0
    %203 = vmatprep.subr.mxu0 0.0
    %204 = vmatpush2.msra.mxu0 0.0
    %205 = vmatprep.subr.mxu0 0.0
    %206 = vmatpush2.msra.mxu0 0.0
    %207 = vmatprep.subr.mxu0 0.0
    %208 = vmatpush2.msra.mxu0 0.0
    %209 = vmatprep.subr.mxu0 0.0
    %210 = vmatpush2.msra.mxu0 0.0
    %211 = vmatprep.subr.mxu0 0.0
    %212 = vmatpush2.msra.mxu0 0.0
    %213 = vmatprep.subr.mxu0 0.0
    %214 = vmatpush2.msra.mxu0 0.0
    %215 = vmatprep.subr.mxu0 0.0
    %216 = vmatpush2.msra.mxu0 0.0
    %217 = vmatprep.subr.mxu0 0.0
    %218 = vmatpush2.msra.mxu0 0.0
    %219 = vmatprep.subr.mxu0 0.0
    %220 = vmatpush2.msra.mxu0 0.0
    %221 = vmatprep.subr.mxu0 0.0
    %222 = vmatpush2.msra.mxu0 0.0
    %223 = vmatprep.subr.mxu0 0.0
    %224 = vmatpush2.msra.mxu0 0.0
    %225 = vmatprep.subr.mxu0 0.0
    %226 = vmatpush2.msra.mxu0 0.0
    %227 = vmatprep.subr.mxu0 0.0
    %228 = vmatpush2.msra.mxu0 0.0
    %229 = vmatprep.subr.mxu0 0.0
    %230 = vmatpush2.msra.mxu0 0.0
    %231 = vmatprep.subr.mxu0 0.0
    %232 = vmatpush2.msra.mxu0 0.0
    %233 = vmatprep.mubr.f32.mxu0 0.0
    %234 = vmatmul.mubr.f32.gmra.mxu0 %v57
    %v235 = vpop.f32.mrf.mxu0
    %v236 = vadd.f32 %v92, %v235
    %v237 = vpop.f32.mrf.mxu0
    %238 = vmatprep.mubr.f32.mxu0 0.0
    %239 = vmatmul.mubr.f32.gmra.mxu0 %v58
    %v240 = vpop.f32.mrf.mxu0
    %v241 = vadd.f32 %v97, %v240
    %v242 = vpop.f32.mrf.mxu0
    %243 = vmatprep.mubr.f32.mxu0 0.0
    %244 = vmatmul.mubr.f32.gmra.mxu0 %v59
    %v245 = vpop.f32.mrf.mxu0
    %v246 = vadd.f32 %v102, %v245
    %v247 = vpop.f32.mrf.mxu0
    %248 = vmatprep.mubr.f32.mxu0 0.0
    %249 = vmatmul.mubr.f32.gmra.mxu0 %v60
    %v250 = vpop.f32.mrf.mxu0
    %v251 = vadd.f32 %v107, %v250
    %v252 = vpop.f32.mrf.mxu0
    %253 = vmatprep.mubr.f32.mxu0 0.0
    %254 = vmatmul.mubr.f32.gmra.mxu0 %v61
    %v255 = vpop.f32.mrf.mxu0
    %v256 = vadd.f32 %v112, %v255
    %v257 = vpop.f32.mrf.mxu0
    %258 = vmatprep.mubr.f32.mxu0 0.0
    %259 = vmatmul.mubr.f32.gmra.mxu0 %v62
    %v260 = vpop.f32.mrf.mxu0
    %v261 = vadd.f32 %v117, %v260
    %v262 = vpop.f32.mrf.mxu0
    %263 = vmatprep.mubr.f32.mxu0 0.0
    %264 = vmatmul.mubr.f32.gmra.mxu0 %v63
    %v265 = vpop.f32.mrf.mxu0
    %v266 = vadd.f32 %v122, %v265
    %v267 = vpop.f32.mrf.mxu0
    %268 = vmatprep.mubr.f32.mxu0 0.0
    %269 = vmatmul.mubr.f32.gmra.mxu0 %v64
    %v270 = vpop.f32.mrf.mxu0
    %v271 = vadd.f32 %v127, %v270
    %v272 = vpop.f32.mrf.mxu0
    %273 = vmatprep.mubr.f32.mxu0 0.0
    %274 = vmatmul.mubr.f32.gmra.mxu0 %v65
    %v275 = vpop.f32.mrf.mxu0
    %v276 = vadd.f32 %v132, %v275
    %v277 = vpop.f32.mrf.mxu0
    %278 = vmatprep.mubr.f32.mxu0 0.0
    %279 = vmatmul.mubr.f32.gmra.mxu0 %v66
    %v280 = vpop.f32.mrf.mxu0
    %v281 = vadd.f32 %v137, %v280
    %v282 = vpop.f32.mrf.mxu0
    %283 = vmatprep.mubr.f32.mxu0 0.0
    %284 = vmatmul.mubr.f32.gmra.mxu0 %v67
    %v285 = vpop.f32.mrf.mxu0
    %v286 = vadd.f32 %v142, %v285
    %v287 = vpop.f32.mrf.mxu0
    %288 = vmatprep.mubr.f32.mxu0 0.0
    %289 = vmatmul.mubr.f32.gmra.mxu0 %v68
    %v290 = vpop.f32.mrf.mxu0
    %v291 = vadd.f32 %v147, %v290
    %v292 = vpop.f32.mrf.mxu0
    %293 = vmatprep.mubr.f32.mxu0 0.0
    %294 = vmatmul.mubr.f32.gmra.mxu0 %v69
    %v295 = vpop.f32.mrf.mxu0
    %v296 = vadd.f32 %v152, %v295
    %v297 = vpop.f32.mrf.mxu0
    %298 = vmatprep.mubr.f32.mxu0 0.0
    %299 = vmatmul.mubr.f32.gmra.mxu0 %v70
    %v300 = vpop.f32.mrf.mxu0
    %v301 = vadd.f32 %v157, %v300
    %v302 = vpop.f32.mrf.mxu0
    %303 = vmatprep.mubr.f32.mxu0 0.0
    %304 = vmatmul.mubr.f32.gmra.mxu0 %v71
    %v305 = vpop.f32.mrf.mxu0
    %v306 = vadd.f32 %v162, %v305
    %v307 = vpop.f32.mrf.mxu0
    %308 = vmatprep.mubr.f32.mxu0 0.0
    %309 = vmatmul.mubr.f32.gmra.mxu0 %v72
    %v310 = vpop.f32.mrf.mxu0
    %v311 = vadd.f32 %v167, %v310
    %v312 = vpop.f32.mrf.mxu0
    %313 = vdwg.mxu0
    %v314 = vmax.f32 %v236, 0.0
    %v315 = vmax.f32 %v241, 0.0
    %v316 = vmax.f32 %v246, 0.0
    %v317 = vmax.f32 %v251, 0.0
    %v318 = vmax.f32 %v256, 0.0
    %v319 = vmax.f32 %v261, 0.0
    %v320 = vmax.f32 %v266, 0.0
    %v321 = vmax.f32 %v271, 0.0
    %v322 = vmax.f32 %v276, 0.0
    %v323 = vmax.f32 %v281, 0.0
    %v324 = vmax.f32 %v286, 0.0
    %v325 = vmax.f32 %v291, 0.0
    %v326 = vmax.f32 %v296, 0.0
    %v327 = vmax.f32 %v301, 0.0
    %v328 = vmax.f32 %v306, 0.0
    %v329 = vmax.f32 %v311, 0.0
    %v330 = vld [vmem:[#allocation2] sm:$0xff]
    %v331 = vld [vmem:[#allocation2 + $0x8] sm:$0xff]
    %v332 = vld [vmem:[#allocation2 + $0x10] sm:$0xff]
    %v333 = vld [vmem:[#allocation2 + $0x18] sm:$0xff]
    %v334 = vld [vmem:[#allocation2 + $0x20] sm:$0xff]
    %v335 = vld [vmem:[#allocation2 + $0x28] sm:$0xff]
    %v336 = vld [vmem:[#allocation2 + $0x30] sm:$0xff]
    %v337 = vld [vmem:[#allocation2 + $0x38] sm:$0xff]
    %v338 = vld [vmem:[#allocation2 + $0x40] sm:$0xff]
    %v339 = vld [vmem:[#allocation2 + $0x48] sm:$0xff]
    %v340 = vld [vmem:[#allocation2 + $0x50] sm:$0xff]
    %v341 = vld [vmem:[#allocation2 + $0x58] sm:$0xff]
    %v342 = vld [vmem:[#allocation2 + $0x60] sm:$0xff]
    %v343 = vld [vmem:[#allocation2 + $0x68] sm:$0xff]
    %v344 = vld [vmem:[#allocation2 + $0x70] sm:$0xff]
    %v345 = vld [vmem:[#allocation2 + $0x78] sm:$0xff]
    %v346 = vld [vmem:[%s4] sm:$0xff]
    %v347 = vld [vmem:[%s4 + $0x8] sm:$0xff]
    %v348 = vld [vmem:[%s4 + $0x10] sm:$0xff]
    %v349 = vld [vmem:[%s4 + $0x18] sm:$0xff]
    %v350 = vld [vmem:[%s4 + $0x20] sm:$0xff]
    %v351 = vld [vmem:[%s4 + $0x28] sm:$0xff]
    %v352 = vld [vmem:[%s4 + $0x30] sm:$0xff]
    %v353 = vld [vmem:[%s4 + $0x38] sm:$0xff]
    %v354 = vld [vmem:[%s4 + $0x40] sm:$0xff]
    %v355 = vld [vmem:[%s4 + $0x48] sm:$0xff]
    %v356 = vld [vmem:[%s4 + $0x50] sm:$0xff]
    %v357 = vld [vmem:[%s4 + $0x58] sm:$0xff]
    %v358 = vld [vmem:[%s4 + $0x60] sm:$0xff]
    %v359 = vld [vmem:[%s4 + $0x68] sm:$0xff]
    %v360 = vld [vmem:[%s4 + $0x70] sm:$0xff]
    %v361 = vld [vmem:[%s4 + $0x78] sm:$0xff]
    %363 = vset.pattern.permute.xlu0 0
    %364 = vperm.xlu0 %363, %v346
    %v365 = vpop.permute.xlu0 %364
    %368 = vset.pattern.permute.xlu0 0
    %369 = vperm.xlu0 %368, %v347
    %v370 = vpop.permute.xlu0 %369
    %373 = vset.pattern.permute.xlu0 0
    %374 = vperm.xlu0 %373, %v348
    %v375 = vpop.permute.xlu0 %374
    %378 = vset.pattern.permute.xlu0 0
    %379 = vperm.xlu0 %378, %v349
    %v380 = vpop.permute.xlu0 %379
    %383 = vset.pattern.permute.xlu0 0
    %384 = vperm.xlu0 %383, %v350
    %v385 = vpop.permute.xlu0 %384
    %388 = vset.pattern.permute.xlu0 0
    %389 = vperm.xlu0 %388, %v351
    %v390 = vpop.permute.xlu0 %389
    %393 = vset.pattern.permute.xlu0 0
    %394 = vperm.xlu0 %393, %v352
    %v395 = vpop.permute.xlu0 %394
    %398 = vset.pattern.permute.xlu0 0
    %399 = vperm.xlu0 %398, %v353
    %v400 = vpop.permute.xlu0 %399
    %403 = vset.pattern.permute.xlu0 0
    %404 = vperm.xlu0 %403, %v354
    %v405 = vpop.permute.xlu0 %404
    %408 = vset.pattern.permute.xlu0 0
    %409 = vperm.xlu0 %408, %v355
    %v410 = vpop.permute.xlu0 %409
    %413 = vset.pattern.permute.xlu0 0
    %414 = vperm.xlu0 %413, %v356
    %v415 = vpop.permute.xlu0 %414
    %418 = vset.pattern.permute.xlu0 0
    %419 = vperm.xlu0 %418, %v357
    %v420 = vpop.permute.xlu0 %419
    %423 = vset.pattern.permute.xlu0 0
    %424 = vperm.xlu0 %423, %v358
    %v425 = vpop.permute.xlu0 %424
    %428 = vset.pattern.permute.xlu0 0
    %429 = vperm.xlu0 %428, %v359
    %v430 = vpop.permute.xlu0 %429
    %433 = vset.pattern.permute.xlu0 0
    %434 = vperm.xlu0 %433, %v360
    %v435 = vpop.permute.xlu0 %434
    %438 = vset.pattern.permute.xlu0 0
    %439 = vperm.xlu0 %438, %v361
    %v440 = vpop.permute.xlu0 %439
    %442 = vmatprep.subr.mxu0 0.0
    %443 = vmatpush1.msra.mxu0 %v329
    %444 = vmatprep.subr.mxu0 0.0
    %445 = vmatpush1.msra.mxu0 %v328
    %446 = vmatprep.subr.mxu0 0.0
    %447 = vmatpush1.msra.mxu0 %v327
    %448 = vmatprep.subr.mxu0 0.0
    %449 = vmatpush1.msra.mxu0 %v326
    %450 = vmatprep.subr.mxu0 0.0
    %451 = vmatpush1.msra.mxu0 %v325
    %452 = vmatprep.subr.mxu0 0.0
    %453 = vmatpush1.msra.mxu0 %v324
    %454 = vmatprep.subr.mxu0 0.0
    %455 = vmatpush1.msra.mxu0 %v323
    %456 = vmatprep.subr.mxu0 0.0
    %457 = vmatpush1.msra.mxu0 %v322
    %458 = vmatprep.subr.mxu0 0.0
    %459 = vmatpush1.msra.mxu0 %v321
    %460 = vmatprep.subr.mxu0 0.0
    %461 = vmatpush1.msra.mxu0 %v320
    %462 = vmatprep.subr.mxu0 0.0
    %463 = vmatpush1.msra.mxu0 %v319
    %464 = vmatprep.subr.mxu0 0.0
    %465 = vmatpush1.msra.mxu0 %v318
    %466 = vmatprep.subr.mxu0 0.0
    %467 = vmatpush1.msra.mxu0 %v317
    %468 = vmatprep.subr.mxu0 0.0
    %469 = vmatpush1.msra.mxu0 %v316
    %470 = vmatprep.subr.mxu0 0.0
    %471 = vmatpush1.msra.mxu0 %v315
    %472 = vmatprep.subr.mxu0 0.0
    %473 = vmatpush1.msra.mxu0 %v314
    %474 = vmatprep.subr.mxu0 0.0
    %475 = vmatpush2.msra.mxu0 0.0
    %476 = vmatprep.subr.mxu0 0.0
    %477 = vmatpush2.msra.mxu0 0.0
    %478 = vmatprep.subr.mxu0 0.0
    %479 = vmatpush2.msra.mxu0 0.0
    %480 = vmatprep.subr.mxu0 0.0
    %481 = vmatpush2.msra.mxu0 0.0
    %482 = vmatprep.subr.mxu0 0.0
    %483 = vmatpush2.msra.mxu0 0.0
    %484 = vmatprep.subr.mxu0 0.0
    %485 = vmatpush2.msra.mxu0 0.0
    %486 = vmatprep.subr.mxu0 0.0
    %487 = vmatpush2.msra.mxu0 0.0
    %488 = vmatprep.subr.mxu0 0.0
    %489 = vmatpush2.msra.mxu0 0.0
    %490 = vmatprep.subr.mxu0 0.0
    %491 = vmatpush2.msra.mxu0 0.0
    %492 = vmatprep.subr.mxu0 0.0
    %493 = vmatpush2.msra.mxu0 0.0
    %494 = vmatprep.subr.mxu0 0.0
    %495 = vmatpush2.msra.mxu0 0.0
    %496 = vmatprep.subr.mxu0 0.0
    %497 = vmatpush2.msra.mxu0 0.0
    %498 = vmatprep.subr.mxu0 0.0
    %499 = vmatpush2.msra.mxu0 0.0
    %500 = vmatprep.subr.mxu0 0.0
    %501 = vmatpush2.msra.mxu0 0.0
    %502 = vmatprep.subr.mxu0 0.0
    %503 = vmatpush2.msra.mxu0 0.0
    %504 = vmatprep.subr.mxu0 0.0
    %505 = vmatpush2.msra.mxu0 0.0
    %506 = vmatprep.mubr.f32.mxu0 0.0
    %507 = vmatmul.mubr.f32.gmra.mxu0 %v330
    %v508 = vpop.f32.mrf.mxu0
    %v509 = vadd.f32 %v365, %v508
    %v510 = vpop.f32.mrf.mxu0
    %511 = vmatprep.mubr.f32.mxu0 0.0
    %512 = vmatmul.mubr.f32.gmra.mxu0 %v331
    %v513 = vpop.f32.mrf.mxu0
    %v514 = vadd.f32 %v370, %v513
    %v515 = vpop.f32.mrf.mxu0
    %516 = vmatprep.mubr.f32.mxu0 0.0
    %517 = vmatmul.mubr.f32.gmra.mxu0 %v332
    %v518 = vpop.f32.mrf.mxu0
    %v519 = vadd.f32 %v375, %v518
    %v520 = vpop.f32.mrf.mxu0
    %521 = vmatprep.mubr.f32.mxu0 0.0
    %522 = vmatmul.mubr.f32.gmra.mxu0 %v333
    %v523 = vpop.f32.mrf.mxu0
    %v524 = vadd.f32 %v380, %v523
    %v525 = vpop.f32.mrf.mxu0
    %526 = vmatprep.mubr.f32.mxu0 0.0
    %527 = vmatmul.mubr.f32.gmra.mxu0 %v334
    %v528 = vpop.f32.mrf.mxu0
    %v529 = vadd.f32 %v385, %v528
    %v530 = vpop.f32.mrf.mxu0
    %531 = vmatprep.mubr.f32.mxu0 0.0
    %532 = vmatmul.mubr.f32.gmra.mxu0 %v335
    %v533 = vpop.f32.mrf.mxu0
    %v534 = vadd.f32 %v390, %v533
    %v535 = vpop.f32.mrf.mxu0
    %536 = vmatprep.mubr.f32.mxu0 0.0
    %537 = vmatmul.mubr.f32.gmra.mxu0 %v336
    %v538 = vpop.f32.mrf.mxu0
    %v539 = vadd.f32 %v395, %v538
    %v540 = vpop.f32.mrf.mxu0
    %541 = vmatprep.mubr.f32.mxu0 0.0
    %542 = vmatmul.mubr.f32.gmra.mxu0 %v337
    %v543 = vpop.f32.mrf.mxu0
    %v544 = vadd.f32 %v400, %v543
    %v545 = vpop.f32.mrf.mxu0
    %546 = vmatprep.mubr.f32.mxu0 0.0
    %547 = vmatmul.mubr.f32.gmra.mxu0 %v338
    %v548 = vpop.f32.mrf.mxu0
    %v549 = vadd.f32 %v405, %v548
    %v550 = vpop.f32.mrf.mxu0
    %551 = vmatprep.mubr.f32.mxu0 0.0
    %552 = vmatmul.mubr.f32.gmra.mxu0 %v339
    %v553 = vpop.f32.mrf.mxu0
    %v554 = vadd.f32 %v410, %v553
    %v555 = vpop.f32.mrf.mxu0
    %556 = vmatprep.mubr.f32.mxu0 0.0
    %557 = vmatmul.mubr.f32.gmra.mxu0 %v340
    %v558 = vpop.f32.mrf.mxu0
    %v559 = vadd.f32 %v415, %v558
    %v560 = vpop.f32.mrf.mxu0
    %561 = vmatprep.mubr.f32.mxu0 0.0
    %562 = vmatmul.mubr.f32.gmra.mxu0 %v341
    %v563 = vpop.f32.mrf.mxu0
    %v564 = vadd.f32 %v420, %v563
    %v565 = vpop.f32.mrf.mxu0
    %566 = vmatprep.mubr.f32.mxu0 0.0
    %567 = vmatmul.mubr.f32.gmra.mxu0 %v342
    %v568 = vpop.f32.mrf.mxu0
    %v569 = vadd.f32 %v425, %v568
    %v570 = vpop.f32.mrf.mxu0
    %571 = vmatprep.mubr.f32.mxu0 0.0
    %572 = vmatmul.mubr.f32.gmra.mxu0 %v343
    %v573 = vpop.f32.mrf.mxu0
    %v574 = vadd.f32 %v430, %v573
    %v575 = vpop.f32.mrf.mxu0
    %576 = vmatprep.mubr.f32.mxu0 0.0
    %577 = vmatmul.mubr.f32.gmra.mxu0 %v344
    %v578 = vpop.f32.mrf.mxu0
    %v579 = vadd.f32 %v435, %v578
    %v580 = vpop.f32.mrf.mxu0
    %581 = vmatprep.mubr.f32.mxu0 0.0
    %582 = vmatmul.mubr.f32.gmra.mxu0 %v345
    %v583 = vpop.f32.mrf.mxu0
    %v584 = vadd.f32 %v440, %v583
    %v585 = vpop.f32.mrf.mxu0
    %586 = vdwg.mxu0
    %v587 = vld [vmem:[%s5] sm:$0xff]
    %v588 = vld [vmem:[%s5 + $0x8] sm:$0xff]
    %v589 = vld [vmem:[%s5 + $0x10] sm:$0xff]
    %v590 = vld [vmem:[%s5 + $0x18] sm:$0xff]
    %v591 = vld [vmem:[%s6] sm:$0xff]
    %v592 = vld [vmem:[%s6 + $0x8] sm:$0xff]
    %v593 = vld [vmem:[%s6 + $0x10] sm:$0xff]
    %v594 = vld [vmem:[%s6 + $0x18] sm:$0xff]
    %596 = vset.pattern.permute.xlu0 0
    %597 = vperm.xlu0 %596, %v591
    %v598 = vpop.permute.xlu0 %597
    %601 = vset.pattern.permute.xlu0 0
    %602 = vperm.xlu0 %601, %v592
    %v603 = vpop.permute.xlu0 %602
    %606 = vset.pattern.permute.xlu0 0
    %607 = vperm.xlu0 %606, %v593
    %v608 = vpop.permute.xlu0 %607
    %611 = vset.pattern.permute.xlu0 0
    %612 = vperm.xlu0 %611, %v594
    %v613 = vpop.permute.xlu0 %612
    %615 = vmatprep.subr.mxu0 0.0
    %616 = vmatpush1.msra.mxu0 %v584
    %617 = vmatprep.subr.mxu0 0.0
    %618 = vmatpush1.msra.mxu0 %v579
    %619 = vmatprep.subr.mxu0 0.0
    %620 = vmatpush1.msra.mxu0 %v574
    %621 = vmatprep.subr.mxu0 0.0
    %622 = vmatpush1.msra.mxu0 %v569
    %623 = vmatprep.subr.mxu0 0.0
    %624 = vmatpush1.msra.mxu0 %v564
    %625 = vmatprep.subr.mxu0 0.0
    %626 = vmatpush1.msra.mxu0 %v559
    %627 = vmatprep.subr.mxu0 0.0
    %628 = vmatpush1.msra.mxu0 %v554
    %629 = vmatprep.subr.mxu0 0.0
    %630 = vmatpush1.msra.mxu0 %v549
    %631 = vmatprep.subr.mxu0 0.0
    %632 = vmatpush1.msra.mxu0 %v544
    %633 = vmatprep.subr.mxu0 0.0
    %634 = vmatpush1.msra.mxu0 %v539
    %635 = vmatprep.subr.mxu0 0.0
    %636 = vmatpush1.msra.mxu0 %v534
    %637 = vmatprep.subr.mxu0 0.0
    %638 = vmatpush1.msra.mxu0 %v529
    %639 = vmatprep.subr.mxu0 0.0
    %640 = vmatpush1.msra.mxu0 %v524
    %641 = vmatprep.subr.mxu0 0.0
    %642 = vmatpush1.msra.mxu0 %v519
    %643 = vmatprep.subr.mxu0 0.0
    %644 = vmatpush1.msra.mxu0 %v514
    %645 = vmatprep.subr.mxu0 0.0
    %646 = vmatpush1.msra.mxu0 %v509
    %647 = vmatprep.subr.mxu0 0.0
    %648 = vmatpush2.msra.mxu0 0.0
    %649 = vmatprep.subr.mxu0 0.0
    %650 = vmatpush2.msra.mxu0 0.0
    %651 = vmatprep.subr.mxu0 0.0
    %652 = vmatpush2.msra.mxu0 0.0
    %653 = vmatprep.subr.mxu0 0.0
    %654 = vmatpush2.msra.mxu0 0.0
    %655 = vmatprep.subr.mxu0 0.0
    %656 = vmatpush2.msra.mxu0 0.0
    %657 = vmatprep.subr.mxu0 0.0
    %658 = vmatpush2.msra.mxu0 0.0
    %659 = vmatprep.subr.mxu0 0.0
    %660 = vmatpush2.msra.mxu0 0.0
    %661 = vmatprep.subr.mxu0 0.0
    %662 = vmatpush2.msra.mxu0 0.0
    %663 = vmatprep.subr.mxu0 0.0
    %664 = vmatpush2.msra.mxu0 0.0
    %665 = vmatprep.subr.mxu0 0.0
    %666 = vmatpush2.msra.mxu0 0.0
    %667 = vmatprep.subr.mxu0 0.0
    %668 = vmatpush2.msra.mxu0 0.0
    %669 = vmatprep.subr.mxu0 0.0
    %670 = vmatpush2.msra.mxu0 0.0
    %671 = vmatprep.subr.mxu0 0.0
    %672 = vmatpush2.msra.mxu0 0.0
    %673 = vmatprep.subr.mxu0 0.0
    %674 = vmatpush2.msra.mxu0 0.0
    %675 = vmatprep.subr.mxu0 0.0
    %676 = vmatpush2.msra.mxu0 0.0
    %677 = vmatprep.subr.mxu0 0.0
    %678 = vmatpush2.msra.mxu0 0.0
    %679 = vmatprep.mubr.f32.mxu0 0.0
    %680 = vmatmul.mubr.f32.gmra.mxu0 %v587
    %v681 = vpop.f32.mrf.mxu0
    %v682 = vadd.f32 %v598, %v681
    %v683 = vpop.f32.mrf.mxu0
    %684 = vmatprep.mubr.f32.mxu0 0.0
    %685 = vmatmul.mubr.f32.gmra.mxu0 %v588
    %v686 = vpop.f32.mrf.mxu0
    %v687 = vadd.f32 %v603, %v686
    %v688 = vpop.f32.mrf.mxu0
    %689 = vmatprep.mubr.f32.mxu0 0.0
    %690 = vmatmul.mubr.f32.gmra.mxu0 %v589
    %v691 = vpop.f32.mrf.mxu0
    %v692 = vadd.f32 %v608, %v691
    %v693 = vpop.f32.mrf.mxu0
    %694 = vmatprep.mubr.f32.mxu0 0.0
    %695 = vmatmul.mubr.f32.gmra.mxu0 %v590
    %v696 = vpop.f32.mrf.mxu0
    %v697 = vadd.f32 %v613, %v696
    %v698 = vpop.f32.mrf.mxu0
    %699 = vdwg.mxu0
    %700 = vst [vmem:[#allocation5] sm:$0xff] %v682
    %701 = vst [vmem:[#allocation5 + $0x8] sm:$0xff] %v687
    %702 = vst [vmem:[#allocation5 + $0x10] sm:$0xff] %v692
    %703 = vst [vmem:[#allocation5 + $0x18] sm:$0xff] %v697
    // Predicated region
    $region34: #{tpu_custom_call.1} parent=1 // pred_check
      _
    $region35: #{tpu_custom_call.1} parent=1 // pred_check_branch
      %705 = sbr.rel (0) target = $region37
    $region36: #{tpu_custom_call.1} parent=1 // pred_region
      %s707 = ssub.s32 512, 512
      %708 = vsyncadd [#allocation4], %s707
      %s709 = sshll.u32 [#allocation5], 4
      %s710 = int_to_ptr.vmem [resolvable:$true] %s709
      %715 = dma.vmem_to_hbm [thread:$0]  %s710, 512, %s7, [#allocation4], 128, 128, 8
    $region37: #{tpu_custom_call.1} parent=1 // pred_fallthru
      _
    // Predicated region
    $region38: #{tpu_custom_call.1} parent=1 // pred_check
      _
    $region39: #{tpu_custom_call.1} parent=1 // pred_check_branch
      %717 = sbr.rel (0) target = $region41
    $region40: #{tpu_custom_call.1} parent=1 // pred_region
      %718 = dma.done [#allocation4], 512
    $region41: #{tpu_custom_call.1} parent=1 // pred_fallthru
      _
    %719 = vsyncpa [#allocation3], 1
    %720 = vsyncpa [#allocation4], 1

</llo_original>
